<compile_context>
chip_gen: v5e
topology: v5e:2x2
jax: 0.10.0
libtpu: 0.0.40
codegen_flags: <defaults>
</compile_context>

<pallas_src>
import functools

import jax
import jax.numpy as jnp
from jax import lax
from jax.experimental import pallas as pl
from jax.experimental.pallas import tpu as pltpu

EPS = 1e-5


def _round_up(n, m):
    return ((n + m - 1) // m) * m


def mlp_pr_kernel(x_ref, batch_ref, doc_ref, w1_ref, wsq_ref, wd_ref,
                  bpack_ref, wheads_ref, bheads_ref, invc_ref,
                  out_ref, acc_ref, *, n_valid):
    """One node tile per grid step; pooled-sum accumulator lives in VMEM scratch.

    bpack rows: 0=b1, 1=b2 (bn1-folded), 2=bd, 3=bf (bn2/bnf-folded).
    wsq slabs:  0=w2 (bn1-folded), 1=wfA (bn2+bnfA-folded), 2=wfB (bnfB-folded).
    Weights (w1, wsq, wd, wheads) arrive in bf16; biases / accumulators are f32.
    """
    i = pl.program_id(0)
    tm = x_ref.shape[0]
    num_graphs = acc_ref.shape[0]

    @pl.when(i == 0)
    def _init():
        acc_ref[...] = jnp.zeros_like(acc_ref)

    # ---- mask the (possibly partial) tail tile before anything touches it ----
    # x is streamed unpadded, so rows >= n_valid of the last tile are stale VMEM
    # garbage; zero them so no NaN/Inf can reach the pooled-sum accumulator.
    row = i * tm + lax.broadcasted_iota(jnp.int32, (tm, 1), 0)
    xv = jnp.where(row < n_valid, x_ref[...], 0.0).astype(jnp.bfloat16)

    # ---- node MLP on this tile (BN folded; bf16 MXU operands, f32 accum) ----
    h = jnp.maximum(
        jnp.dot(xv, w1_ref[...], preferred_element_type=jnp.float32)
        + bpack_ref[0:1, :], 0.0)
    h = jnp.maximum(
        jnp.dot(h.astype(jnp.bfloat16), wsq_ref[0],
                preferred_element_type=jnp.float32)
        + bpack_ref[1:2, :], 0.0)
    # dropout (p=0.3): eval-mode identity.

    # ---- partial segment-sum via in-kernel one-hot (padded batch ids = -1) ----
    gid = lax.broadcasted_iota(jnp.int32, (num_graphs, tm), 0)
    onehot = (batch_ref[...] == gid).astype(jnp.bfloat16)          # [G, tm]
    acc_ref[...] += jnp.dot(onehot, h.astype(jnp.bfloat16),
                            preferred_element_type=jnp.float32)

    # ---- epilogue: doc path + fusion + fused heads, last tile only ----
    @pl.when(i == pl.num_programs(0) - 1)
    def _finalize():
        pooled = acc_ref[...] * invc_ref[...]                       # mean pool, f32
        d = jnp.maximum(
            jnp.dot(doc_ref[...].astype(jnp.bfloat16), wd_ref[...],
                    preferred_element_type=jnp.float32)
            + bpack_ref[2:3, :], 0.0)
        fusion = jnp.maximum(
            jnp.dot(pooled.astype(jnp.bfloat16), wsq_ref[1],
                    preferred_element_type=jnp.float32)
            + jnp.dot(d.astype(jnp.bfloat16), wsq_ref[2],
                      preferred_element_type=jnp.float32)
            + bpack_ref[3:4, :], 0.0)
        # dropout: eval identity.  Fused lane-dense heads: [task | time | 0-pad].
        out_ref[...] = (jnp.dot(fusion.astype(jnp.bfloat16), wheads_ref[...],
                                preferred_element_type=jnp.float32)
                        + bheads_ref[...])


def _fold_bn(bn):
    # bn rows: gamma, beta, running_mean, running_var -> affine (scale, shift)
    g, be, m, v = bn[0], bn[1], bn[2], bn[3]
    s = g * lax.rsqrt(v + EPS)
    return s, be - m * s


def mlp_pr_forward(x, doc_features, batch, params, *, node_tile=1024):
    assert node_tile % 128 == 0
    N, Din = x.shape
    G, Ddoc = doc_features.shape
    H = params["w1"].shape[1]
    Dout = params["wt"].shape[1]
    DP = _round_up(Dout + 1, 128)      # fused + lane-padded head width

    # ---- fold inference BatchNorms into adjacent linears (exact, f32) ----
    a1, c1 = _fold_bn(params["bn1"])
    a2, c2 = _fold_bn(params["bn2"])
    aA, cA = _fold_bn(params["bnfA"])  # bnf, first H channels (pooled half)
    aB, cB = _fold_bn(params["bnfB"])  # bnf, second H channels (doc half)

    w2f = a1[:, None] * params["w2"]
    b2f = params["b2"] + (c1 @ params["w2"])[None, :]
    effA, effcA = a2 * aA, c2 * aA + cA          # bn2 commutes through mean-pool
    wfAf = effA[:, None] * params["wfA"]
    wfBf = aB[:, None] * params["wfB"]
    bff = params["bf"] + (effcA @ params["wfA"] + cB @ params["wfB"])[None, :]

    # MXU operands -> bf16 (one-time, tiny); biases stay f32.
    wsq = jnp.stack([w2f, wfAf, wfBf], axis=0).astype(jnp.bfloat16)           # [3,H,H]
    bpack = jnp.concatenate([params["b1"], b2f, params["bd"], bff], axis=0)   # [4,H]
    w1_b = params["w1"].astype(jnp.bfloat16)
    wd_b = params["wd"].astype(jnp.bfloat16)

    # ---- fused + lane-padded output heads ----
    wheads = jnp.zeros((H, DP), jnp.float32)
    wheads = wheads.at[:, :Dout].set(params["wt"])
    wheads = wheads.at[:, Dout:Dout + 1].set(params["wtm"])
    wheads = wheads.astype(jnp.bfloat16)
    bheads = jnp.zeros((1, DP), jnp.float32)
    bheads = bheads.at[:, :Dout].set(params["bt"])
    bheads = bheads.at[:, Dout:Dout + 1].set(params["btm"])

    # ---- mean-pool normalization (no O(G*N) one-hot in HBM) ----
    counts = jnp.bincount(batch.astype(jnp.int32), length=G).astype(jnp.float32)
    inv_counts = (1.0 / jnp.maximum(counts, 1.0))[:, None]                    # [G,1]

    # ---- node tiling: x streamed UNPADDED (partial tail tile masked in-kernel);
    #      only the tiny [1, n_pad] batch-id row is padded with -1. ----
    if N <= node_tile:
        tm = _round_up(max(N, 8), 8)      # single tile
    else:
        tm = node_tile                    # multiple of 128
    n_tiles = pl.cdiv(N, tm)
    n_pad = n_tiles * tm
    batch_p = jnp.full((1, n_pad), -1, jnp.int32).at[0, :N].set(
        batch.astype(jnp.int32))

    flops = (2 * N * Din * H + 2 * N * H * H + 2 * N * G * H
             + 2 * G * Ddoc * H + 4 * G * H * H + 2 * G * H * DP)
    bytes_accessed = (4 * (N * Din + n_pad + G * Ddoc + 4 * H + DP + G + G * DP)
                      + 2 * (Din * H + 3 * H * H + Ddoc * H + H * DP))

    kernel = functools.partial(mlp_pr_kernel, n_valid=N)

    fused = pl.pallas_call(
        kernel,
        out_shape=jax.ShapeDtypeStruct((G, DP), jnp.float32),
        grid_spec=pltpu.PrefetchScalarGridSpec(
            num_scalar_prefetch=0,
            grid=(n_tiles,),
            in_specs=[
                pl.BlockSpec((tm, Din), lambda i: (i, 0)),      # x tile (streamed, f32)
                pl.BlockSpec((1, tm), lambda i: (0, i)),        # batch ids tile
                pl.BlockSpec((G, Ddoc), lambda i: (0, 0)),      # doc features
                pl.BlockSpec((Din, H), lambda i: (0, 0)),       # w1 (bf16)
                pl.BlockSpec((3, H, H), lambda i: (0, 0, 0)),   # w2|wfA|wfB (bf16, folded)
                pl.BlockSpec((Ddoc, H), lambda i: (0, 0)),      # wd (bf16)
                pl.BlockSpec((4, H), lambda i: (0, 0)),         # packed biases (f32)
                pl.BlockSpec((H, DP), lambda i: (0, 0)),        # fused heads W (bf16)
                pl.BlockSpec((1, DP), lambda i: (0, 0)),        # fused heads b (f32)
                pl.BlockSpec((G, 1), lambda i: (0, 0)),         # 1 / node count
            ],
            out_specs=pl.BlockSpec((G, DP), lambda i: (0, 0)),
            scratch_shapes=[pltpu.VMEM((G, H), jnp.float32)],   # pooled-sum acc
        ),
        compiler_params=pltpu.CompilerParams(
            dimension_semantics=("arbitrary",),                 # carries accumulator
            vmem_limit_bytes=64 * 1024 * 1024,
        ),
        cost_estimate=pl.CostEstimate(flops=flops, transcendentals=0,
                                      bytes_accessed=bytes_accessed),
    )(x, batch_p, doc_features, w1_b, wsq, wd_b,
      bpack, wheads, bheads, inv_counts)

    return fused[:, :Dout], fused[:, Dout:Dout + 1]


def _reference_forward(x, doc, batch, p):
    def bn(h, b):
        g, be, m, v = b[0], b[1], b[2], b[3]
        return (h - m) / jnp.sqrt(v + EPS) * g + be
    h = jax.nn.relu(x @ p["w1"] + p["b1"])
    h = bn(h, p["bn1"])
    h = jax.nn.relu(h @ p["w2"] + p["b2"])
    h = bn(h, p["bn2"])
    G = doc.shape[0]
    P = (batch[None, :] == jnp.arange(G)[:, None]).astype(jnp.float32)
    pooled = (P @ h) / jnp.maximum(P.sum(1, keepdims=True), 1.0)
    d = jax.nn.relu(doc @ p["wd"] + p["bd"])
    fA, fB = bn(pooled, p["bnfA"]), bn(d, p["bnfB"])
    f = jax.nn.relu(fA @ p["wfA"] + fB @ p["wfB"] + p["bf"])
    return f @ p["wt"] + p["bt"], f @ p["wtm"] + p["btm"]


if __name__ == "__main__":
    key = jax.random.PRNGKey(0)
    input_dim, hidden_dim, output_dim, doc_dim = 8, 32, 4, 12
    N, G = 16, 2
    ks = jax.random.split(key, 12)

    def lin(k, din, dout):
        kw, kb = jax.random.split(k)
        bound = 1.0 / jnp.sqrt(din)
        w = jax.random.uniform(kw, (din, dout), jnp.float32, -bound, bound)
        b = jax.random.uniform(kb, (1, dout), jnp.float32, -bound, bound)
        return w, b

    def bn_params(k, dim):
        kg, kb, km, kv = jax.random.split(k, 4)
        g = 1.0 + 0.1 * jax.random.normal(kg, (dim,))
        b = 0.1 * jax.random.normal(kb, (dim,))
        m = 0.1 * jax.random.normal(km, (dim,))
        v = 1.0 + 0.1 * jax.random.uniform(kv, (dim,))
        return jnp.stack([g, b, m, v]).astype(jnp.float32)   # [4, dim]

    w1, b1 = lin(ks[0], input_dim, hidden_dim)
    w2, b2 = lin(ks[1], hidden_dim, hidden_dim)
    wd, bd = lin(ks[2], doc_dim, hidden_dim)
    wf, bf = lin(ks[3], 2 * hidden_dim, hidden_dim)
    wt, bt = lin(ks[4], hidden_dim, output_dim)
    wtm, btm = lin(ks[5], hidden_dim, 1)
    bn1 = bn_params(ks[6], hidden_dim)
    bn2 = bn_params(ks[7], hidden_dim)
    bnf = bn_params(ks[8], 2 * hidden_dim)

    params = dict(
        w1=w1, b1=b1, bn1=bn1,
        w2=w2, b2=b2, bn2=bn2,
        wd=wd, bd=bd,
        bnfA=bnf[:, :hidden_dim], bnfB=bnf[:, hidden_dim:],
        wfA=wf[:hidden_dim], wfB=wf[hidden_dim:], bf=bf,
        wt=wt, bt=bt, wtm=wtm, btm=btm,
    )

    x = jax.random.normal(ks[9], (N, input_dim), jnp.float32)
    doc = jax.random.normal(ks[10], (G, doc_dim), jnp.float32)
    batch = jnp.array([0] * 9 + [1] * 7, dtype=jnp.int32)   # node -> graph id

    task_out, time_out = mlp_pr_forward(x, doc, batch, params)
    jax.block_until_ready((task_out, time_out))

    ref_task, ref_time = _reference_forward(x, doc, batch, params)
    # bf16 MXU operands -> ~1e-2 level agreement with the f32 reference.
    assert jnp.allclose(task_out, ref_task, atol=5e-2, rtol=5e-2)
    assert jnp.allclose(time_out, ref_time, atol=5e-2, rtol=5e-2)

    print("KERNEL_OK")
</pallas_src>

<mosaic_0001>
module attributes {stable_mosaic.version = 11 : i64} {
  func.func @mlp_pr_kernel(%arg0: i32, %arg1: memref<16x8xf32, #tpu.memory_space<vmem>>, %arg2: memref<1x16xi32, #tpu.memory_space<vmem>>, %arg3: memref<2x12xf32, #tpu.memory_space<vmem>>, %arg4: memref<8x32xbf16, #tpu.memory_space<vmem>>, %arg5: memref<3x32x32xbf16, #tpu.memory_space<vmem>>, %arg6: memref<12x32xbf16, #tpu.memory_space<vmem>>, %arg7: memref<4x32xf32, #tpu.memory_space<vmem>>, %arg8: memref<32x128xbf16, #tpu.memory_space<vmem>>, %arg9: memref<1x128xf32, #tpu.memory_space<vmem>>, %arg10: memref<2x1xf32, #tpu.memory_space<vmem>>, %arg11: memref<2x128xf32, #tpu.memory_space<vmem>>, %arg12: memref<2x32xf32, #tpu.memory_space<vmem>>) attributes {dimension_semantics = [#tpu.dimension_semantics<arbitrary>], iteration_bounds = array<i64: 1>, scalar_prefetch = 0 : i64, scratch_operands = 1 : i64, tpu.core_type = #tpu.core_type<tc>, window_params = [{transform_indices = @transform_0, window_bounds = array<i64: 16, 8>}, {transform_indices = @transform_1, window_bounds = array<i64: 1, 16>}, {pipeline_mode = #tpu.pipeline_mode<synchronous>, transform_indices = @transform_2, window_bounds = array<i64: 2, 12>}, {pipeline_mode = #tpu.pipeline_mode<synchronous>, transform_indices = @transform_3, window_bounds = array<i64: 8, 32>}, {pipeline_mode = #tpu.pipeline_mode<synchronous>, transform_indices = @transform_4, window_bounds = array<i64: 3, 32, 32>}, {pipeline_mode = #tpu.pipeline_mode<synchronous>, transform_indices = @transform_5, window_bounds = array<i64: 12, 32>}, {pipeline_mode = #tpu.pipeline_mode<synchronous>, transform_indices = @transform_6, window_bounds = array<i64: 4, 32>}, {pipeline_mode = #tpu.pipeline_mode<synchronous>, transform_indices = @transform_7, window_bounds = array<i64: 32, 128>}, {pipeline_mode = #tpu.pipeline_mode<synchronous>, transform_indices = @transform_8, window_bounds = array<i64: 1, 128>}, {pipeline_mode = #tpu.pipeline_mode<synchronous>, transform_indices = @transform_9, window_bounds = array<i64: 2, 1>}, {pipeline_mode = #tpu.pipeline_mode<synchronous>, transform_indices = @transform_10, window_bounds = array<i64: 2, 128>}]} {
    %c0_i32 = arith.constant 0 : i32
    %0 = arith.cmpi eq, %arg0, %c0_i32 : i32
    %1 = arith.extui %0 : i1 to i32
    %c0_i32_0 = arith.constant 0 : i32
    %2 = arith.cmpi ne, %1, %c0_i32_0 : i32
    scf.if %2 {
      %cst_24 = arith.constant 0.000000e+00 : f32
      %46 = vector.broadcast %cst_24 : f32 to vector<2x32xf32>
      %c0_25 = arith.constant 0 : index
      %c0_26 = arith.constant 0 : index
      %47 = vector.load %arg12[%c0_25, %c0_26] : memref<2x32xf32, #tpu.memory_space<vmem>>, vector<2x32xf32>
      tpu.vector_store %arg12[%c0_25, %c0_26], %46 {strides = array<i32>} : memref<2x32xf32, #tpu.memory_space<vmem>>, vector<2x32xf32>,
    } else {
    }
    %c16_i32 = arith.constant 16 : i32
    %3 = arith.muli %arg0, %c16_i32 : i32
    %4 = tpu.iota {dimensions = array<i32: 0>} : vector<16x1xi32>
    %5 = vector.broadcast %3 : i32 to vector<16x1xi32>
    %6 = arith.addi %5, %4 : vector<16x1xi32>
    %c16_i32_1 = arith.constant 16 : i32
    %7 = vector.broadcast %c16_i32_1 : i32 to vector<16x1xi32>
    %8 = arith.cmpi slt, %6, %7 : vector<16x1xi32>
    %c0 = arith.constant 0 : index
    %c0_2 = arith.constant 0 : index
    %9 = vector.load %arg1[%c0, %c0_2] : memref<16x8xf32, #tpu.memory_space<vmem>>, vector<16x8xf32>
    %cst = arith.constant 0.000000e+00 : f32
    %10 = vector.shape_cast %8 : vector<16x1xi1> to vector<16x1xi1>
    %11 = vector.broadcast %10 : vector<16x1xi1> to vector<16x8xi1>
    %12 = vector.broadcast %cst : f32 to vector<16x8xf32>
    %13 = arith.select %11, %9, %12 : vector<16x8xi1>, vector<16x8xf32>
    %14 = arith.truncf %13 : vector<16x8xf32> to vector<16x8xbf16>
    %c0_3 = arith.constant 0 : index
    %c0_4 = arith.constant 0 : index
    %15 = vector.load %arg4[%c0_3, %c0_4] : memref<8x32xbf16, #tpu.memory_space<vmem>>, vector<8x32xbf16>
    %cst_5 = arith.constant dense<0.000000e+00> : vector<16x32xf32>
    %16 = tpu.matmul %14, %15, %cst_5 {dimension_numbers = #tpu.dot_dimension_numbers<[1], [0], [0], [1], [0, 0, 1, 1], [], []>} : vector<16x8xbf16>, vector<8x32xbf16>, vector<16x32xf32> -> vector<16x32xf32>
    %c0_6 = arith.constant 0 : index
    %c0_7 = arith.constant 0 : index
    %17 = vector.load %arg7[%c0_6, %c0_7] : memref<4x32xf32, #tpu.memory_space<vmem>>, vector<1x32xf32>
    %18 = vector.broadcast %17 : vector<1x32xf32> to vector<16x32xf32>
    %19 = arith.addf %16, %18 : vector<16x32xf32>
    %cst_8 = arith.constant 0.000000e+00 : f32
    %20 = vector.broadcast %cst_8 : f32 to vector<16x32xf32>
    %21 = arith.maximumf %19, %20 : vector<16x32xf32>
    %22 = arith.truncf %21 : vector<16x32xf32> to vector<16x32xbf16>
    %c0_9 = arith.constant 0 : index
    %c0_10 = arith.constant 0 : index
    %c0_11 = arith.constant 0 : index
    %23 = vector.load %arg5[%c0_9, %c0_10, %c0_11] : memref<3x32x32xbf16, #tpu.memory_space<vmem>>, vector<1x32x32xbf16>
    %24 = vector.shape_cast %23 : vector<1x32x32xbf16> to vector<32x32xbf16>
    %cst_12 = arith.constant dense<0.000000e+00> : vector<16x32xf32>
    %25 = tpu.matmul %22, %24, %cst_12 {dimension_numbers = #tpu.dot_dimension_numbers<[1], [0], [0], [1], [0, 0, 1, 1], [], []>} : vector<16x32xbf16>, vector<32x32xbf16>, vector<16x32xf32> -> vector<16x32xf32>
    %c1 = arith.constant 1 : index
    %c0_13 = arith.constant 0 : index
    %26 = vector.load %arg7[%c1, %c0_13] : memref<4x32xf32, #tpu.memory_space<vmem>>, vector<1x32xf32>
    %27 = vector.broadcast %26 : vector<1x32xf32> to vector<16x32xf32>
    %28 = arith.addf %25, %27 : vector<16x32xf32>
    %cst_14 = arith.constant 0.000000e+00 : f32
    %29 = vector.broadcast %cst_14 : f32 to vector<16x32xf32>
    %30 = arith.maximumf %28, %29 : vector<16x32xf32>
    %31 = tpu.iota {dimensions = array<i32: 0>} : vector<2x16xi32>
    %c0_15 = arith.constant 0 : index
    %c0_16 = arith.constant 0 : index
    %32 = vector.load %arg2[%c0_15, %c0_16] : memref<1x16xi32, #tpu.memory_space<vmem>>, vector<1x16xi32>
    %33 = vector.broadcast %32 : vector<1x16xi32> to vector<2x16xi32>
    %34 = arith.cmpi eq, %33, %31 : vector<2x16xi32>
    %35 = arith.extui %34 : vector<2x16xi1> to vector<2x16xi32>
    %36 = arith.sitofp %35 : vector<2x16xi32> to vector<2x16xf32>
    %37 = arith.truncf %36 : vector<2x16xf32> to vector<2x16xbf16>
    %c0_17 = arith.constant 0 : index
    %c0_18 = arith.constant 0 : index
    %38 = vector.load %arg12[%c0_17, %c0_18] : memref<2x32xf32, #tpu.memory_space<vmem>>, vector<2x32xf32>
    %39 = arith.truncf %30 : vector<16x32xf32> to vector<16x32xbf16>
    %cst_19 = arith.constant dense<0.000000e+00> : vector<2x32xf32>
    %40 = tpu.matmul %37, %39, %cst_19 {dimension_numbers = #tpu.dot_dimension_numbers<[1], [0], [0], [1], [0, 0, 1, 1], [], []>} : vector<2x16xbf16>, vector<16x32xbf16>, vector<2x32xf32> -> vector<2x32xf32>
    %41 = arith.addf %38, %40 : vector<2x32xf32>
    %c0_20 = arith.constant 0 : index
    %c0_21 = arith.constant 0 : index
    %42 = vector.load %arg12[%c0_20, %c0_21] : memref<2x32xf32, #tpu.memory_space<vmem>>, vector<2x32xf32>
    tpu.vector_store %arg12[%c0_20, %c0_21], %41 {strides = array<i32>} : memref<2x32xf32, #tpu.memory_space<vmem>>, vector<2x32xf32>,
    %c0_i32_22 = arith.constant 0 : i32
    %43 = arith.cmpi eq, %arg0, %c0_i32_22 : i32
    %44 = arith.extui %43 : i1 to i32
    %c0_i32_23 = arith.constant 0 : i32
    %45 = arith.cmpi ne, %44, %c0_i32_23 : i32
    scf.if %45 {
      %c0_24 = arith.constant 0 : index
      %c0_25 = arith.constant 0 : index
      %46 = vector.load %arg12[%c0_24, %c0_25] : memref<2x32xf32, #tpu.memory_space<vmem>>, vector<2x32xf32>
      %c0_26 = arith.constant 0 : index
      %c0_27 = arith.constant 0 : index
      %47 = vector.load %arg10[%c0_26, %c0_27] : memref<2x1xf32, #tpu.memory_space<vmem>>, vector<2x1xf32>
      %48 = vector.broadcast %47 : vector<2x1xf32> to vector<2x32xf32>
      %49 = arith.mulf %46, %48 : vector<2x32xf32>
      %c0_28 = arith.constant 0 : index
      %c0_29 = arith.constant 0 : index
      %50 = vector.load %arg3[%c0_28, %c0_29] : memref<2x12xf32, #tpu.memory_space<vmem>>, vector<2x12xf32>
      %51 = arith.truncf %50 : vector<2x12xf32> to vector<2x12xbf16>
      %c0_30 = arith.constant 0 : index
      %c0_31 = arith.constant 0 : index
      %52 = vector.load %arg6[%c0_30, %c0_31] : memref<12x32xbf16, #tpu.memory_space<vmem>>, vector<12x32xbf16>
      %cst_32 = arith.constant dense<0.000000e+00> : vector<2x32xf32>
      %53 = tpu.matmul %51, %52, %cst_32 {dimension_numbers = #tpu.dot_dimension_numbers<[1], [0], [0], [1], [0, 0, 1, 1], [], []>} : vector<2x12xbf16>, vector<12x32xbf16>, vector<2x32xf32> -> vector<2x32xf32>
      %c2 = arith.constant 2 : index
      %c0_33 = arith.constant 0 : index
      %54 = vector.load %arg7[%c2, %c0_33] : memref<4x32xf32, #tpu.memory_space<vmem>>, vector<1x32xf32>
      %55 = vector.broadcast %54 : vector<1x32xf32> to vector<2x32xf32>
      %56 = arith.addf %53, %55 : vector<2x32xf32>
      %cst_34 = arith.constant 0.000000e+00 : f32
      %57 = vector.broadcast %cst_34 : f32 to vector<2x32xf32>
      %58 = arith.maximumf %56, %57 : vector<2x32xf32>
      %59 = arith.truncf %49 : vector<2x32xf32> to vector<2x32xbf16>
      %c1_35 = arith.constant 1 : index
      %c0_36 = arith.constant 0 : index
      %c0_37 = arith.constant 0 : index
      %60 = vector.load %arg5[%c1_35, %c0_36, %c0_37] : memref<3x32x32xbf16, #tpu.memory_space<vmem>>, vector<1x32x32xbf16>
      %61 = vector.shape_cast %60 : vector<1x32x32xbf16> to vector<32x32xbf16>
      %cst_38 = arith.constant dense<0.000000e+00> : vector<2x32xf32>
      %62 = tpu.matmul %59, %61, %cst_38 {dimension_numbers = #tpu.dot_dimension_numbers<[1], [0], [0], [1], [0, 0, 1, 1], [], []>} : vector<2x32xbf16>, vector<32x32xbf16>, vector<2x32xf32> -> vector<2x32xf32>
      %63 = arith.truncf %58 : vector<2x32xf32> to vector<2x32xbf16>
      %c2_39 = arith.constant 2 : index
      %c0_40 = arith.constant 0 : index
      %c0_41 = arith.constant 0 : index
      %64 = vector.load %arg5[%c2_39, %c0_40, %c0_41] : memref<3x32x32xbf16, #tpu.memory_space<vmem>>, vector<1x32x32xbf16>
      %65 = vector.shape_cast %64 : vector<1x32x32xbf16> to vector<32x32xbf16>
      %cst_42 = arith.constant dense<0.000000e+00> : vector<2x32xf32>
      %66 = tpu.matmul %63, %65, %cst_42 {dimension_numbers = #tpu.dot_dimension_numbers<[1], [0], [0], [1], [0, 0, 1, 1], [], []>} : vector<2x32xbf16>, vector<32x32xbf16>, vector<2x32xf32> -> vector<2x32xf32>
      %67 = arith.addf %62, %66 : vector<2x32xf32>
      %c3 = arith.constant 3 : index
      %c0_43 = arith.constant 0 : index
      %68 = vector.load %arg7[%c3, %c0_43] : memref<4x32xf32, #tpu.memory_space<vmem>>, vector<1x32xf32>
      %69 = vector.broadcast %68 : vector<1x32xf32> to vector<2x32xf32>
      %70 = arith.addf %67, %69 : vector<2x32xf32>
      %cst_44 = arith.constant 0.000000e+00 : f32
      %71 = vector.broadcast %cst_44 : f32 to vector<2x32xf32>
      %72 = arith.maximumf %70, %71 : vector<2x32xf32>
      %73 = arith.truncf %72 : vector<2x32xf32> to vector<2x32xbf16>
      %c0_45 = arith.constant 0 : index
      %c0_46 = arith.constant 0 : index
      %74 = vector.load %arg8[%c0_45, %c0_46] : memref<32x128xbf16, #tpu.memory_space<vmem>>, vector<32x128xbf16>
      %cst_47 = arith.constant dense<0.000000e+00> : vector<2x128xf32>
      %75 = tpu.matmul %73, %74, %cst_47 {dimension_numbers = #tpu.dot_dimension_numbers<[1], [0], [0], [1], [0, 0, 1, 1], [], []>} : vector<2x32xbf16>, vector<32x128xbf16>, vector<2x128xf32> -> vector<2x128xf32>
      %c0_48 = arith.constant 0 : index
      %c0_49 = arith.constant 0 : index
      %76 = vector.load %arg9[%c0_48, %c0_49] : memref<1x128xf32, #tpu.memory_space<vmem>>, vector<1x128xf32>
      %77 = vector.broadcast %76 : vector<1x128xf32> to vector<2x128xf32>
      %78 = arith.addf %75, %77 : vector<2x128xf32>
      %c0_50 = arith.constant 0 : index
      %c0_51 = arith.constant 0 : index
      %79 = vector.load %arg11[%c0_50, %c0_51] : memref<2x128xf32, #tpu.memory_space<vmem>>, vector<2x128xf32>
      tpu.vector_store %arg11[%c0_50, %c0_51], %78 {strides = array<i32>} : memref<2x128xf32, #tpu.memory_space<vmem>>, vector<2x128xf32>,
    } else {
    }
    return
  }
  func.func @transform_0(%arg0: i32) -> (i32, i32) {
    %c0_i32 = arith.constant 0 : i32
    %c0_i32_0 = arith.constant 0 : i32
    return %arg0, %c0_i32 : i32, i32
  }
  func.func @transform_1(%arg0: i32) -> (i32, i32) {
    %c0_i32 = arith.constant 0 : i32
    %c0_i32_0 = arith.constant 0 : i32
    return %c0_i32, %arg0 : i32, i32
  }
  func.func @transform_2(%arg0: i32) -> (i32, i32) {
    %c0_i32 = arith.constant 0 : i32
    %c0_i32_0 = arith.constant 0 : i32
    %c0_i32_1 = arith.constant 0 : i32
    return %c0_i32, %c0_i32_0 : i32, i32
  }
  func.func @transform_3(%arg0: i32) -> (i32, i32) {
    %c0_i32 = arith.constant 0 : i32
    %c0_i32_0 = arith.constant 0 : i32
    %c0_i32_1 = arith.constant 0 : i32
    return %c0_i32, %c0_i32_0 : i32, i32
  }
  func.func @transform_4(%arg0: i32) -> (i32, i32, i32) {
    %c0_i32 = arith.constant 0 : i32
    %c0_i32_0 = arith.constant 0 : i32
    %c0_i32_1 = arith.constant 0 : i32
    %c0_i32_2 = arith.constant 0 : i32
    return %c0_i32, %c0_i32_0, %c0_i32_1 : i32, i32, i32
  }
  func.func @transform_5(%arg0: i32) -> (i32, i32) {
    %c0_i32 = arith.constant 0 : i32
    %c0_i32_0 = arith.constant 0 : i32
    %c0_i32_1 = arith.constant 0 : i32
    return %c0_i32, %c0_i32_0 : i32, i32
  }
  func.func @transform_6(%arg0: i32) -> (i32, i32) {
    %c0_i32 = arith.constant 0 : i32
    %c0_i32_0 = arith.constant 0 : i32
    %c0_i32_1 = arith.constant 0 : i32
    return %c0_i32, %c0_i32_0 : i32, i32
  }
  func.func @transform_7(%arg0: i32) -> (i32, i32) {
    %c0_i32 = arith.constant 0 : i32
    %c0_i32_0 = arith.constant 0 : i32
    %c0_i32_1 = arith.constant 0 : i32
    return %c0_i32, %c0_i32_0 : i32, i32
  }
  func.func @transform_8(%arg0: i32) -> (i32, i32) {
    %c0_i32 = arith.constant 0 : i32
    %c0_i32_0 = arith.constant 0 : i32
    %c0_i32_1 = arith.constant 0 : i32
    return %c0_i32, %c0_i32_0 : i32, i32
  }
  func.func @transform_9(%arg0: i32) -> (i32, i32) {
    %c0_i32 = arith.constant 0 : i32
    %c0_i32_0 = arith.constant 0 : i32
    %c0_i32_1 = arith.constant 0 : i32
    return %c0_i32, %c0_i32_0 : i32, i32
  }
  func.func @transform_10(%arg0: i32) -> (i32, i32) {
    %c0_i32 = arith.constant 0 : i32
    %c0_i32_0 = arith.constant 0 : i32
    %c0_i32_1 = arith.constant 0 : i32
    return %c0_i32, %c0_i32_0 : i32, i32
  }
}

</mosaic_0001>

<llo_original>
// kernel: tpu_custom_call.1
$region0: #{tpu_custom_call.1}
  #allocation0 [shape = 'u32[]', space=smem, size = 0x4, offset = 0x4, fixed_abs, tag = 'smem constant byte address 0x4 - core index']
  #allocation1 [shape = 'u32[72,128]{1,0:T(1,128)}', space=vmem, size = 0x9000, scoped, tag = 'internal scratch']
  #allocation2 [shape = 'f32[2,32]{1,0:T(2,128)}', space=vmem, size = 0x400, scoped, tag = 'scratch operand']
  %s0 = inlined_call_operand.vmem [shape: f32[16,8], index: 0, kind: input, shape index: {}]
  %s1 = inlined_call_operand.hbm [shape: s32[1,16], index: 1, kind: input, shape index: {}]
  %s2 = inlined_call_operand.hbm [shape: f32[2,12], index: 2, kind: input, shape index: {}]
  %s3 = inlined_call_operand.vmem [shape: bf16[8,32], index: 3, kind: input, shape index: {}]
  %s4 = inlined_call_operand.hbm [shape: bf16[3,32,32], index: 4, kind: input, shape index: {}]
  %s5 = inlined_call_operand.vmem [shape: bf16[12,32], index: 5, kind: input, shape index: {}]
  %s6 = inlined_call_operand.vmem [shape: f32[4,32], index: 6, kind: input, shape index: {}]
  %s7 = inlined_call_operand.vmem [shape: bf16[32,128], index: 7, kind: input, shape index: {}]
  %s8 = inlined_call_operand.vmem [shape: f32[1,128], index: 8, kind: input, shape index: {}]
  %s9 = inlined_call_operand.vmem [shape: f32[2,1], index: 9, kind: input, shape index: {}]
  %s10 = inlined_call_operand.hbm [shape: f32[2,128], index: 10, kind: output, shape index: {}]
  %s11 = sld [smem:[#allocation0]]
  $region70: #{tpu_custom_call.1} parent=0
    _
  %s13 = ssub.s32 1, %s11
  %s14 = scalar_select 0, %s13, %s11
  $region1: #{tpu_custom_call.1} parent=0
    #allocation3 [shape = 'u8[512]{0}', space=vmem, size = 0x400, scoped, tag = 'input window, operand 1, single buffered']
    #allocation4 [shape = 's32[1]{0}', space=sflag, size = 0x4, scoped, tag = 'scoped memory for tpu_custom_call.1']
    #allocation5 [shape = 's32[1]{0}', space=sflag, size = 0x4, scoped, tag = 'scoped memory for tpu_custom_call.1']
    #allocation6 [shape = 'u8[1024]{0}', space=vmem, size = 0x400, scoped, tag = 'input window, operand 2, single buffered']
    #allocation7 [shape = 's32[1]{0}', space=sflag, size = 0x4, scoped, tag = 'scoped memory for tpu_custom_call.1']
    #allocation8 [shape = 'u8[24576]{0}', space=vmem, size = 0x6000, scoped, tag = 'input window, operand 4, single buffered']
    #allocation9 [shape = 'u8[1024]{0}', space=vmem, size = 0x400, scoped, tag = 'output window, operand 0, single buffered']
    %15 = vsyncpa [#allocation4], 0
    %16 = vsyncpa [#allocation7], 0
    %17 = vsyncpa [#allocation5], 0
    // Predicated region
    $region2: #{tpu_custom_call.1} parent=1 // pred_check
      _
    $region3: #{tpu_custom_call.1} parent=1 // pred_check_branch
      %19 = sbr.rel (0) target = $region5
    $region4: #{tpu_custom_call.1} parent=1 // pred_region
      _
    $region5: #{tpu_custom_call.1} parent=1 // pred_fallthru
      _
    // Predicated region
    $region6: #{tpu_custom_call.1} parent=1 // pred_check
      _
    $region7: #{tpu_custom_call.1} parent=1 // pred_check_branch
      %21 = sbr.rel (0) target = $region9
    $region8: #{tpu_custom_call.1} parent=1 // pred_region
      %23 = vsyncadd [#allocation4], 0
      %s25 = sshll.u32 %s1, 4
      %s26 = int_to_ptr.hbm [resolvable:$true] %s25
      %s27 = sshll.u32 [#allocation3], 4
      %s28 = int_to_ptr.vmem [resolvable:$true] %s27
      %30 = dma.hbm_to_vmem [thread:$0]  %s26, 16, %s28, [#allocation4]
    $region9: #{tpu_custom_call.1} parent=1 // pred_fallthru
      _
    // Predicated region
    $region10: #{tpu_custom_call.1} parent=1 // pred_check
      _
    $region11: #{tpu_custom_call.1} parent=1 // pred_check_branch
      %32 = sbr.rel (0) target = $region13
    $region12: #{tpu_custom_call.1} parent=1 // pred_region
      %34 = vsyncadd [#allocation7], 0
      %s36 = sshll.u32 %s2, 4
      %s37 = int_to_ptr.hbm [resolvable:$true] %s36
      %s38 = sshll.u32 [#allocation6], 4
      %s39 = int_to_ptr.vmem [resolvable:$true] %s38
      %41 = dma.hbm_to_vmem [thread:$0]  %s37, 32, %s39, [#allocation7]
    $region13: #{tpu_custom_call.1} parent=1 // pred_fallthru
      _
    // Predicated region
    $region14: #{tpu_custom_call.1} parent=1 // pred_check
      _
    $region15: #{tpu_custom_call.1} parent=1 // pred_check_branch
      %43 = sbr.rel (0) target = $region17
    $region16: #{tpu_custom_call.1} parent=1 // pred_region
      _
    $region17: #{tpu_custom_call.1} parent=1 // pred_fallthru
      _
    // Predicated region
    $region18: #{tpu_custom_call.1} parent=1 // pred_check
      _
    $region19: #{tpu_custom_call.1} parent=1 // pred_check_branch
      %45 = sbr.rel (0) target = $region21
    $region20: #{tpu_custom_call.1} parent=1 // pred_region
      %47 = vsyncadd [#allocation7], 0
      %s48 = sshll.u32 %s4, 4
      %s49 = int_to_ptr.hbm [resolvable:$true] %s48
      %s50 = sshll.u32 [#allocation8], 4
      %s51 = int_to_ptr.vmem [resolvable:$true] %s50
      %56 = dma.hbm_to_vmem [thread:$0]  %s49, 768, %s51, [#allocation7], 64, 64, 4
    $region21: #{tpu_custom_call.1} parent=1 // pred_fallthru
      _
    // Predicated region
    $region22: #{tpu_custom_call.1} parent=1 // pred_check
      _
    $region23: #{tpu_custom_call.1} parent=1 // pred_check_branch
      %58 = sbr.rel (0) target = $region25
    $region24: #{tpu_custom_call.1} parent=1 // pred_region
      _
    $region25: #{tpu_custom_call.1} parent=1 // pred_fallthru
      _
    // Predicated region
    $region26: #{tpu_custom_call.1} parent=1 // pred_check
      _
    $region27: #{tpu_custom_call.1} parent=1 // pred_check_branch
      %60 = sbr.rel (0) target = $region29
    $region28: #{tpu_custom_call.1} parent=1 // pred_region
      _
    $region29: #{tpu_custom_call.1} parent=1 // pred_fallthru
      _
    // Predicated region
    $region30: #{tpu_custom_call.1} parent=1 // pred_check
      _
    $region31: #{tpu_custom_call.1} parent=1 // pred_check_branch
      %62 = sbr.rel (0) target = $region33
    $region32: #{tpu_custom_call.1} parent=1 // pred_region
      _
    $region33: #{tpu_custom_call.1} parent=1 // pred_fallthru
      _
    // Predicated region
    $region34: #{tpu_custom_call.1} parent=1 // pred_check
      _
    $region35: #{tpu_custom_call.1} parent=1 // pred_check_branch
      %64 = sbr.rel (0) target = $region37
    $region36: #{tpu_custom_call.1} parent=1 // pred_region
      _
    $region37: #{tpu_custom_call.1} parent=1 // pred_fallthru
      _
    // Predicated region
    $region38: #{tpu_custom_call.1} parent=1 // pred_check
      _
    $region39: #{tpu_custom_call.1} parent=1 // pred_check_branch
      %66 = sbr.rel (0) target = $region41
    $region40: #{tpu_custom_call.1} parent=1 // pred_region
      _
    $region41: #{tpu_custom_call.1} parent=1 // pred_fallthru
      _
    // Predicated region
    $region42: #{tpu_custom_call.1} parent=1 // pred_check
      _
    $region43: #{tpu_custom_call.1} parent=1 // pred_check_branch
      %68 = sbr.rel (0) target = $region45
    $region44: #{tpu_custom_call.1} parent=1 // pred_region
      %70 = dma.done [#allocation4], 16
    $region45: #{tpu_custom_call.1} parent=1 // pred_fallthru
      _
    // Predicated region
    $region46: #{tpu_custom_call.1} parent=1 // pred_check
      _
    $region47: #{tpu_custom_call.1} parent=1 // pred_check_branch
      %72 = sbr.rel (0) target = $region49
    $region48: #{tpu_custom_call.1} parent=1 // pred_region
      %74 = dma.done [#allocation7], 32
    $region49: #{tpu_custom_call.1} parent=1 // pred_fallthru
      _
    // Predicated region
    $region50: #{tpu_custom_call.1} parent=1 // pred_check
      _
    $region51: #{tpu_custom_call.1} parent=1 // pred_check_branch
      %76 = sbr.rel (0) target = $region53
    $region52: #{tpu_custom_call.1} parent=1 // pred_region
      %78 = dma.done [#allocation7], 768
    $region53: #{tpu_custom_call.1} parent=1 // pred_fallthru
      _
    %p80 = scmp.eq.s32.totalorder 0, 0
    // Predicated region
    $region54: #{tpu_custom_call.1} parent=1 // pred_check
      %p81 = pneg %p80
    $region55: #{tpu_custom_call.1} parent=1 // pred_check_branch
      %83 = sbr.rel (%p81) target = $region57
    $region56: #{tpu_custom_call.1} parent=1 // pred_region
      %vm84 = vcmask 254976
      %85 = vst.msk [vmem:[#allocation2] sm:$0x3] %vm84, 0.0
    $region57: #{tpu_custom_call.1} parent=1 // pred_fallthru
      _
    %s86 = smul.u32 0, 16
    %v87 = vlaneseq
    %v88 = vshrl.u32 %v87, 7
    %v89 = vadd.s32 %v88, 8
    %v90 = vstv %s86
    %v91 = vadd.s32 %v90, %v88
    %v92 = vadd.s32 %v90, %v89
    %vm93 = vcmp.lt.s32.totalorder %v91, 16
    %vm94 = vcmp.lt.s32.totalorder %v92, 16
    %v95 = vld [vmem:[%s0] sm:$0xff]
    %v96 = vld [vmem:[%s0 + $0x8] sm:$0xff]
    %v97 = vsel %vm93, 1, 0
    %v98 = vsel %vm94, 1, 0
    %vm99 = vcmp.eq.s32.totalorder %v97, 1
    %vm100 = vcmp.eq.s32.totalorder %v98, 1
    %v101 = vsel %vm99, %v95, 0.0
    %v102 = vsel %vm100, %v96, 0.0
    %v103 = vpack.c.bf16 %v102, %v101
    %v104 = vld [vmem:[%s3] sm:$0xf]
    %v105 = vld [vmem:[%s6] sm:$0x1]
    %v106 = vperm.slane %v105, 0
    %vm107 = vcmask 64512
    %v109 = vsel %vm107, %v103, 0
    %vm111 = vcmask 1043456
    %v113 = vsel %vm111, %v104, 0
    %115 = vmatpush.bf16.msra.mxu0 0
    %116 = vmatpush.bf16.msra.mxu0 0
    %117 = vmatpush.bf16.msra.mxu0 0
    %118 = vmatpush.bf16.msra.mxu0 0
    %119 = vmatpush.bf16.msra.mxu0 0
    %120 = vmatpush.bf16.msra.mxu0 0
    %121 = vmatpush.bf16.msra.mxu0 0
    %122 = vmatpush.bf16.msra.mxu0 %v113
    %123 = vmatmul.bf16.gmra.mxu0 %v109
    %v124 = vpop.f32.mrf.mxu0
    %v125 = vadd.f32 %v106, %v124
    %v126 = vpop.f32.mrf.mxu0
    %v127 = vadd.f32 %v106, %v126
    %128 = vdwg.mxu0
    %v129 = vmax.f32 %v125, 0.0
    %v130 = vmax.f32 %v127, 0.0
    %v131 = vpack.c.bf16 %v130, %v129
    %v132 = vld [vmem:[#allocation8] sm:$0xf]
    %v133 = vld [vmem:[#allocation8 + $0x4] sm:$0xf]
    %v134 = vld [vmem:[#allocation8 + $0x8] sm:$0xf]
    %v135 = vld [vmem:[#allocation8 + $0xc] sm:$0xf]
    %v136 = vld [vmem:[%s6 + $0x1] sm:$0x1]
    %v137 = vperm.slane %v136, 0
    %v142 = vunpack.c.l.b16 %v132
    %v143 = vunpack.c.l.b16 %v133
    %v144 = vunpack.c.l.b16 %v134
    %v145 = vunpack.c.l.b16 %v135
    %v146 = vpack.c.b16 %v143, %v142
    %v147 = vpack.c.b16 %v145, %v144
    %vm150 = vcmask 261120
    %v152 = vsel %vm150, %v131, 0
    %154 = vmatpush.bf16.msra.mxu0 0
    %155 = vmatpush.bf16.msra.mxu0 0
    %156 = vmatpush.bf16.msra.mxu0 0
    %157 = vmatpush.bf16.msra.mxu0 0
    %158 = vmatpush.bf16.msra.mxu0 0
    %159 = vmatpush.bf16.msra.mxu0 0
    %160 = vmatpush.bf16.msra.mxu0 %v147
    %161 = vmatpush.bf16.msra.mxu0 %v146
    %162 = vmatmul.bf16.gmra.mxu0 %v152
    %v163 = vpop.f32.mrf.mxu0
    %v164 = vadd.f32 %v137, %v163
    %v165 = vpop.f32.mrf.mxu0
    %v166 = vadd.f32 %v137, %v165
    %167 = vdwg.mxu0
    %v168 = vmax.f32 %v164, 0.0
    %v169 = vmax.f32 %v166, 0.0
    %v170 = vld [vmem:[#allocation3] sm:$0x1]
    %v171 = vperm.slane %v170, 0
    %vm172 = vcmp.eq.s32.totalorder %v171, %v88
    %v173 = vsel %vm172, 1, 0
    %v174 = vcvt.s32.f32 %v173
    %v175 = vpack.c.bf16 %v174, %v174
    %v176 = vld [vmem:[#allocation2] sm:$0x3]
    %v177 = vpack.c.bf16 %v169, %v168
    %vm178 = vcmask 130048
    %v180 = vsel %vm178, %v175, 0
    %182 = vmatpush.bf16.msra.mxu0 0
    %183 = vmatpush.bf16.msra.mxu0 0
    %184 = vmatpush.bf16.msra.mxu0 0
    %185 = vmatpush.bf16.msra.mxu0 0
    %186 = vmatpush.bf16.msra.mxu0 0
    %187 = vmatpush.bf16.msra.mxu0 0
    %188 = vmatpush.bf16.msra.mxu0 0
    %189 = vmatpush.bf16.msra.mxu0 %v177
    %190 = vmatmul.bf16.gmra.mxu0 %v180
    %v191 = vpop.f32.mrf.mxu0
    %v192 = vadd.f32 0.0, %v191
    %v193 = vpop.f32.mrf.mxu0
    %194 = vdwg.mxu0
    %v195 = vadd.f32 %v176, %v192
    %vm196 = vcmask 254976
    %197 = vst.msk [vmem:[#allocation2] sm:$0x3] %vm196, %v195
    // Predicated region
    $region58: #{tpu_custom_call.1} parent=1 // pred_check
      %p198 = pneg %p80
    $region59: #{tpu_custom_call.1} parent=1 // pred_check_branch
      %200 = sbr.rel (%p198) target = $region61
    $region60: #{tpu_custom_call.1} parent=1 // pred_region
      %v201 = vld [vmem:[#allocation2] sm:$0x3]
      %v202 = vld [vmem:[%s9] sm:$0x3]
      %204 = vset.pattern.permute.xlu0 0
      %205 = vperm.xlu0 %204, %v202
      %v206 = vpop.permute.xlu0 %205
      %v208 = vmul.f32 %v201, %v206
      %v209 = vld [vmem:[#allocation6] sm:$0x3]
      %v210 = vpack.c.bf16 %v209, %v209
      %v211 = vld [vmem:[%s5] sm:$0xf]
      %v212 = vld [vmem:[%s5 + $0x4] sm:$0x3]
      %v213 = vld [vmem:[%s6 + $0x2] sm:$0x1]
      %v214 = vperm.slane %v213, 0
      %v217 = vunpack.c.l.b16 %v211
      %v218 = vunpack.c.l.b16 %v212
      %v219 = vpack.c.b16 %v218, %v217
      %vm220 = vcmask 97280
      %v222 = vsel %vm220, %v210, 0
      %vm224 = vcmask 1045504
      %v226 = vsel %vm224, %v219, 0
      %228 = vmatpush.bf16.msra.mxu0 0
      %229 = vmatpush.bf16.msra.mxu0 0
      %230 = vmatpush.bf16.msra.mxu0 0
      %231 = vmatpush.bf16.msra.mxu0 0
      %232 = vmatpush.bf16.msra.mxu0 0
      %233 = vmatpush.bf16.msra.mxu0 0
      %234 = vmatpush.bf16.msra.mxu0 0
      %235 = vmatpush.bf16.msra.mxu0 %v226
      %236 = vmatmul.bf16.gmra.mxu0 %v222
      %v237 = vpop.f32.mrf.mxu0
      %v238 = vadd.f32 %v214, %v237
      %v239 = vpop.f32.mrf.mxu0
      %240 = vdwg.mxu0
      %v241 = vmax.f32 %v238, 0.0
      %v242 = vpack.c.bf16 %v208, %v208
      %s243 = scalar_lea.vmem [#allocation8], 16
      %v244 = vld [vmem:[%s243] sm:$0xf]
      %v245 = vld [vmem:[%s243 + $0x4] sm:$0xf]
      %v246 = vld [vmem:[%s243 + $0x8] sm:$0xf]
      %v247 = vld [vmem:[%s243 + $0xc] sm:$0xf]
      %v248 = vpack.c.bf16 %v241, %v241
      %s249 = scalar_lea.vmem [#allocation8], 32
      %v250 = vld [vmem:[%s249] sm:$0xf]
      %v251 = vld [vmem:[%s249 + $0x4] sm:$0xf]
      %v252 = vld [vmem:[%s249 + $0x8] sm:$0xf]
      %v253 = vld [vmem:[%s249 + $0xc] sm:$0xf]
      %v258 = vunpack.c.l.b16 %v250
      %v259 = vunpack.c.l.b16 %v251
      %v260 = vunpack.c.l.b16 %v252
      %v261 = vunpack.c.l.b16 %v253
      %v262 = vpack.c.b16 %v259, %v258
      %v263 = vpack.c.b16 %v261, %v260
      %v267 = vsel %vm150, %v248, 0
      %269 = vmatpush.bf16.msra.mxu0 0
      %270 = vmatpush.bf16.msra.mxu0 0
      %271 = vmatpush.bf16.msra.mxu0 0
      %272 = vmatpush.bf16.msra.mxu0 0
      %273 = vmatpush.bf16.msra.mxu0 0
      %274 = vmatpush.bf16.msra.mxu0 0
      %275 = vmatpush.bf16.msra.mxu0 %v263
      %276 = vmatpush.bf16.msra.mxu0 %v262
      %277 = vmatmul.bf16.gmra.mxu0 %v267
      %v278 = vpop.f32.mrf.mxu0
      %v279 = vadd.f32 0.0, %v278
      %v280 = vpop.f32.mrf.mxu0
      %281 = vdwg.mxu0
      %v286 = vunpack.c.l.b16 %v244
      %v287 = vunpack.c.l.b16 %v245
      %v288 = vunpack.c.l.b16 %v246
      %v289 = vunpack.c.l.b16 %v247
      %v290 = vpack.c.b16 %v287, %v286
      %v291 = vpack.c.b16 %v289, %v288
      %v295 = vsel %vm150, %v242, 0
      %297 = vmatpush.bf16.msra.mxu0 0
      %298 = vmatpush.bf16.msra.mxu0 0
      %299 = vmatpush.bf16.msra.mxu0 0
      %300 = vmatpush.bf16.msra.mxu0 0
      %301 = vmatpush.bf16.msra.mxu0 0
      %302 = vmatpush.bf16.msra.mxu0 0
      %303 = vmatpush.bf16.msra.mxu0 %v291
      %304 = vmatpush.bf16.msra.mxu0 %v290
      %305 = vmatmul.bf16.gmra.mxu0 %v295
      %v306 = vpop.f32.mrf.mxu0
      %v307 = vadd.f32 %v279, %v306
      %v308 = vpop.f32.mrf.mxu0
      %309 = vdwg.mxu0
      %v310 = vld [vmem:[%s6 + $0x3] sm:$0x1]
      %v311 = vperm.slane %v310, 0
      %v312 = vadd.f32 %v307, %v311
      %v313 = vmax.f32 %v312, 0.0
      %v314 = vpack.c.bf16 %v313, %v313
      %v315 = vld [vmem:[%s7] sm:$0xf]
      %v316 = vld [vmem:[%s7 + $0x4] sm:$0xf]
      %v317 = vld [vmem:[%s7 + $0x8] sm:$0xf]
      %v318 = vld [vmem:[%s7 + $0xc] sm:$0xf]
      %v319 = vld [vmem:[%s8] sm:$0x1]
      %v321 = vperm.slane %v319, 0
      %v327 = vunpack.c.l.b16 %v315
      %v328 = vunpack.c.l.b16 %v316
      %v329 = vunpack.c.l.b16 %v317
      %v330 = vunpack.c.l.b16 %v318
      %v331 = vpack.c.b16 %v328, %v327
      %v332 = vpack.c.b16 %v330, %v329
      %v336 = vsel %vm150, %v314, 0
      %338 = vmatpush.bf16.msra.mxu0 0
      %339 = vmatpush.bf16.msra.mxu0 0
      %340 = vmatpush.bf16.msra.mxu0 0
      %341 = vmatpush.bf16.msra.mxu0 0
      %342 = vmatpush.bf16.msra.mxu0 0
      %343 = vmatpush.bf16.msra.mxu0 0
      %344 = vmatpush.bf16.msra.mxu0 %v332
      %345 = vmatpush.bf16.msra.mxu0 %v331
      %346 = vmatmul.bf16.gmra.mxu0 %v336
      %v347 = vpop.f32.mrf.mxu0
      %v348 = vadd.f32 %v321, %v347
      %v349 = vpop.f32.mrf.mxu0
      %350 = vdwg.mxu0
      %351 = vst [vmem:[#allocation9] sm:$0x3] %v348
    $region61: #{tpu_custom_call.1} parent=1 // pred_fallthru
      _
    // Predicated region
    $region62: #{tpu_custom_call.1} parent=1 // pred_check
      _
    $region63: #{tpu_custom_call.1} parent=1 // pred_check_branch
      %353 = sbr.rel (0) target = $region65
    $region64: #{tpu_custom_call.1} parent=1 // pred_region
      %355 = vsyncadd [#allocation5], 0
      %s357 = sshll.u32 [#allocation9], 4
      %s358 = int_to_ptr.vmem [resolvable:$true] %s357
      %s359 = sshll.u32 %s10, 4
      %s360 = int_to_ptr.hbm [resolvable:$true] %s359
      %362 = dma.vmem_to_hbm [thread:$0]  %s358, 32, %s360, [#allocation5]
    $region65: #{tpu_custom_call.1} parent=1 // pred_fallthru
      _
    // Predicated region
    $region66: #{tpu_custom_call.1} parent=1 // pred_check
      _
    $region67: #{tpu_custom_call.1} parent=1 // pred_check_branch
      %364 = sbr.rel (0) target = $region69
    $region68: #{tpu_custom_call.1} parent=1 // pred_region
      %366 = dma.done [#allocation5], 32
    $region69: #{tpu_custom_call.1} parent=1 // pred_fallthru
      _
    %367 = vsyncpa [#allocation4], 1
    %368 = vsyncpa [#allocation7], 1
    %369 = vsyncpa [#allocation5], 1

</llo_original>
